<compile_context>
chip_gen: v7x
topology: tpu7x:2x2x1
jax: 0.10.0
libtpu: 0.0.40
codegen_flags: <defaults>
</compile_context>

<pallas_src>
import jax
import jax.numpy as jnp
from jax.experimental import pallas as pl
from jax.experimental.pallas import tpu as pltpu


def ew_linear_kernel(x_ref, w_ref, b_ref, o_ref):
    # (tile_m, size) * (1, size) + (1, size) -> broadcast over rows (VPU only).
    o_ref[...] = (x_ref[...] * w_ref[...] + b_ref[...]).astype(o_ref.dtype)


def _pick_tile_m(n_rows, size, itemsize):
    # Large row tiles to amortize the ~0.35us per-grid-step pipeline overhead,
    # while keeping the double-buffered x-tile + out-tile well under the scoped
    # VMEM limit on every generation (v5e/v6e 128 MiB, v7x 64 MiB physical).
    if n_rows <= 512:
        return n_rows                       # full-extent block is always legal
    vmem_budget = 16 * 1024 * 1024          # conservative across v5e/v6e/v7x
    cap = vmem_budget // (4 * size * itemsize)   # 2 buffers each for x and out
    tile = max(8, min(512, cap))
    return (tile // 8) * 8                  # sublane (8) aligned


def elementwise_linear(x, weight=None, bias=None):
    """y = x * weight + bias with weight/bias broadcast along the last dim."""
    orig_shape = x.shape
    size = orig_shape[-1]
    n_rows = 1
    for d in orig_shape[:-1]:
        n_rows *= d
    x2 = x.reshape(n_rows, size)

    if weight is None:   # module built with weight=False -> identity scale
        weight = jnp.ones((size,), x.dtype)
    if bias is None:     # module built with bias=False -> zero shift
        bias = jnp.zeros((size,), x.dtype)
    w2 = jnp.asarray(weight, x.dtype).reshape(1, size)
    b2 = jnp.asarray(bias, x.dtype).reshape(1, size)

    itemsize = x.dtype.itemsize
    tile_m = _pick_tile_m(n_rows, size, itemsize)
    grid = (pl.cdiv(n_rows, tile_m),)

    cost = pl.CostEstimate(
        flops=2 * n_rows * size,                                  # mul + add
        transcendentals=0,
        bytes_accessed=(2 * n_rows * size + 2 * size) * itemsize,  # x + out + w + b
    )

    out2 = pl.pallas_call(
        ew_linear_kernel,
        out_shape=jax.ShapeDtypeStruct((n_rows, size), x.dtype),
        grid=grid,
        in_specs=[
            pl.BlockSpec((tile_m, size), lambda i: (i, 0)),   # x row-tile
            pl.BlockSpec((1, size), lambda i: (0, 0)),        # weight (resident)
            pl.BlockSpec((1, size), lambda i: (0, 0)),        # bias   (resident)
        ],
        out_specs=pl.BlockSpec((tile_m, size), lambda i: (i, 0)),
        compiler_params=pltpu.CompilerParams(
            dimension_semantics=("parallel",)),
        cost_estimate=cost,
    )(x2, w2, b2)
    # TODO(synk): inplace=True has no JAX equivalent (arrays are immutable); the
    # out-of-place result is numerically identical. Use buffer donation /
    # input_output_aliases at the call site if in-place memory reuse is needed.
    return out2.reshape(orig_shape)


def elementwise_linear_ref(x, weight, bias):
    y = x * weight if weight is not None else x
    y = y + bias if bias is not None else y
    return y


if __name__ == "__main__":
    key = jax.random.PRNGKey(0)
    kx, kw, kb = jax.random.split(key, 3)

    size = 16
    x = jax.random.normal(kx, (2, 4, 16, size), jnp.float32)

    # 1) Default module init (reset_parameters): weight = ones, bias = zeros.
    w_def = jnp.ones((size,), jnp.float32)
    b_def = jnp.zeros((size,), jnp.float32)
    out_def = jax.block_until_ready(elementwise_linear(x, w_def, b_def))
    assert out_def.shape == x.shape
    assert jnp.allclose(out_def, x, atol=1e-6, rtol=1e-6), "identity init mismatch"

    # 2) Random weight / bias to exercise the broadcast math.
    w = jax.random.normal(kw, (size,), jnp.float32)
    b = jax.random.normal(kb, (size,), jnp.float32)
    out = jax.block_until_ready(elementwise_linear(x, w, b))
    ref = elementwise_linear_ref(x, w, b)
    assert out.shape == x.shape
    assert jnp.allclose(out, ref, atol=1e-6, rtol=1e-6), "mismatch vs reference"

    print("KERNEL_OK")
</pallas_src>

<mosaic_0001>
module attributes {stable_mosaic.version = 11 : i64} {
  func.func @ew_linear_kernel(%arg0: i32, %arg1: memref<128x16xf32, #tpu.memory_space<vmem>>, %arg2: memref<1x16xf32, #tpu.memory_space<vmem>>, %arg3: memref<1x16xf32, #tpu.memory_space<vmem>>, %arg4: memref<128x16xf32, #tpu.memory_space<vmem>>) attributes {dimension_semantics = [#tpu.dimension_semantics<parallel>], iteration_bounds = array<i64: 1>, scalar_prefetch = 0 : i64, scratch_operands = 0 : i64, tpu.core_type = #tpu.core_type<tc>, window_params = [{transform_indices = @transform_0, window_bounds = array<i64: 128, 16>}, {pipeline_mode = #tpu.pipeline_mode<synchronous>, transform_indices = @transform_1, window_bounds = array<i64: 1, 16>}, {pipeline_mode = #tpu.pipeline_mode<synchronous>, transform_indices = @transform_2, window_bounds = array<i64: 1, 16>}, {transform_indices = @transform_3, window_bounds = array<i64: 128, 16>}]} {
    %c0 = arith.constant 0 : index
    %c0_0 = arith.constant 0 : index
    %0 = vector.load %arg1[%c0, %c0_0] : memref<128x16xf32, #tpu.memory_space<vmem>>, vector<128x16xf32>
    %c0_1 = arith.constant 0 : index
    %c0_2 = arith.constant 0 : index
    %1 = vector.load %arg2[%c0_1, %c0_2] : memref<1x16xf32, #tpu.memory_space<vmem>>, vector<1x16xf32>
    %2 = vector.broadcast %1 : vector<1x16xf32> to vector<128x16xf32>
    %3 = arith.mulf %0, %2 : vector<128x16xf32>
    %c0_3 = arith.constant 0 : index
    %c0_4 = arith.constant 0 : index
    %4 = vector.load %arg3[%c0_3, %c0_4] : memref<1x16xf32, #tpu.memory_space<vmem>>, vector<1x16xf32>
    %5 = vector.broadcast %4 : vector<1x16xf32> to vector<128x16xf32>
    %6 = arith.addf %3, %5 : vector<128x16xf32>
    %c0_5 = arith.constant 0 : index
    %c0_6 = arith.constant 0 : index
    %7 = vector.load %arg4[%c0_5, %c0_6] : memref<128x16xf32, #tpu.memory_space<vmem>>, vector<128x16xf32>
    tpu.vector_store %arg4[%c0_5, %c0_6], %6 {strides = array<i32>} : memref<128x16xf32, #tpu.memory_space<vmem>>, vector<128x16xf32>,
    return
  }
  func.func @transform_0(%arg0: i32) -> (i32, i32) {
    %c0_i32 = arith.constant 0 : i32
    %c0_i32_0 = arith.constant 0 : i32
    return %arg0, %c0_i32 : i32, i32
  }
  func.func @transform_1(%arg0: i32) -> (i32, i32) {
    %c0_i32 = arith.constant 0 : i32
    %c0_i32_0 = arith.constant 0 : i32
    %c0_i32_1 = arith.constant 0 : i32
    return %c0_i32, %c0_i32_0 : i32, i32
  }
  func.func @transform_2(%arg0: i32) -> (i32, i32) {
    %c0_i32 = arith.constant 0 : i32
    %c0_i32_0 = arith.constant 0 : i32
    %c0_i32_1 = arith.constant 0 : i32
    return %c0_i32, %c0_i32_0 : i32, i32
  }
  func.func @transform_3(%arg0: i32) -> (i32, i32) {
    %c0_i32 = arith.constant 0 : i32
    %c0_i32_0 = arith.constant 0 : i32
    return %arg0, %c0_i32 : i32, i32
  }
}

</mosaic_0001>

<llo_original>
// kernel: tpu_custom_call.1
$region0: #{tpu_custom_call.1}
  #allocation0 [shape = 'u32[]', space=smem, size = 0x4, offset = 0x4, fixed_abs, tag = 'smem constant byte address 0x4 - core index']
  #allocation1 [shape = 'u32[144,128]{1,0:T(1,128)}', space=vmem, size = 0x12000, scoped, tag = 'internal scratch']
  %s0 = inlined_call_operand.vmem [shape: f32[128,16], index: 0, kind: input, shape index: {}]
  %s1 = inlined_call_operand.vmem [shape: f32[1,16], index: 1, kind: input, shape index: {}]
  %s2 = inlined_call_operand.vmem [shape: f32[1,16], index: 2, kind: input, shape index: {}]
  %s3 = inlined_call_operand.vmem [shape: f32[128,16], index: 3, kind: output, shape index: {}]
  %s4 = sld [smem:[#allocation0]]
  $region22: #{tpu_custom_call.1} parent=0
    _
  %s6 = ssub.s32 1, %s4
  %s7 = scalar_select 0, %s6, %s4
  // Predicated region
  $region2: #{tpu_custom_call.1} parent=0 // pred_check
    _
  $region3: #{tpu_custom_call.1} parent=0 // pred_check_branch
    %9 = sbr.rel (0) target = $region5
  $region4: #{tpu_custom_call.1} parent=0 // pred_region
    _
  $region5: #{tpu_custom_call.1} parent=0 // pred_fallthru
    _
  // Predicated region
  $region6: #{tpu_custom_call.1} parent=0 // pred_check
    _
  $region7: #{tpu_custom_call.1} parent=0 // pred_check_branch
    %11 = sbr.rel (0) target = $region9
  $region8: #{tpu_custom_call.1} parent=0 // pred_region
    _
  $region9: #{tpu_custom_call.1} parent=0 // pred_fallthru
    _
  // Predicated region
  $region10: #{tpu_custom_call.1} parent=0 // pred_check
    _
  $region11: #{tpu_custom_call.1} parent=0 // pred_check_branch
    %13 = sbr.rel (0) target = $region13
  $region12: #{tpu_custom_call.1} parent=0 // pred_region
    _
  $region13: #{tpu_custom_call.1} parent=0 // pred_fallthru
    _
  %v14 = vld [vmem:[%s0] sm:$0xff]
  %v15 = vld [vmem:[%s0 + $0x8] sm:$0xff]
  %v16 = vld [vmem:[%s0 + $0x10] sm:$0xff]
  %v17 = vld [vmem:[%s0 + $0x18] sm:$0xff]
  %v18 = vld [vmem:[%s0 + $0x20] sm:$0xff]
  %v19 = vld [vmem:[%s0 + $0x28] sm:$0xff]
  %v20 = vld [vmem:[%s0 + $0x30] sm:$0xff]
  %v21 = vld [vmem:[%s0 + $0x38] sm:$0xff]
  %v22 = vld [vmem:[%s0 + $0x40] sm:$0xff]
  %v23 = vld [vmem:[%s0 + $0x48] sm:$0xff]
  %v24 = vld [vmem:[%s0 + $0x50] sm:$0xff]
  %v25 = vld [vmem:[%s0 + $0x58] sm:$0xff]
  %v26 = vld [vmem:[%s0 + $0x60] sm:$0xff]
  %v27 = vld [vmem:[%s0 + $0x68] sm:$0xff]
  %v28 = vld [vmem:[%s0 + $0x70] sm:$0xff]
  %v29 = vld [vmem:[%s0 + $0x78] sm:$0xff]
  %v30 = vld [vmem:[%s1] sm:$0x1]
  %v32 = vlaneseq
  %v33 = vshrl.u32 %v32, 7
  %v34 = vsub.s32 0, %v33
  %v35 = vrot.slane %v30, %v34
  %v37 = vmul.f32 %v14, %v35
  %v38 = vmul.f32 %v15, %v35
  %v39 = vmul.f32 %v16, %v35
  %v40 = vmul.f32 %v17, %v35
  %v41 = vmul.f32 %v18, %v35
  %v42 = vmul.f32 %v19, %v35
  %v43 = vmul.f32 %v20, %v35
  %v44 = vmul.f32 %v21, %v35
  %v45 = vmul.f32 %v22, %v35
  %v46 = vmul.f32 %v23, %v35
  %v47 = vmul.f32 %v24, %v35
  %v48 = vmul.f32 %v25, %v35
  %v49 = vmul.f32 %v26, %v35
  %v50 = vmul.f32 %v27, %v35
  %v51 = vmul.f32 %v28, %v35
  %v52 = vmul.f32 %v29, %v35
  %v53 = vld [vmem:[%s2] sm:$0x1]
  %v55 = vlaneseq
  %v56 = vshrl.u32 %v55, 7
  %v57 = vsub.s32 0, %v56
  %v58 = vrot.slane %v53, %v57
  %v60 = vadd.f32 %v37, %v58
  %v61 = vadd.f32 %v38, %v58
  %v62 = vadd.f32 %v39, %v58
  %v63 = vadd.f32 %v40, %v58
  %v64 = vadd.f32 %v41, %v58
  %v65 = vadd.f32 %v42, %v58
  %v66 = vadd.f32 %v43, %v58
  %v67 = vadd.f32 %v44, %v58
  %v68 = vadd.f32 %v45, %v58
  %v69 = vadd.f32 %v46, %v58
  %v70 = vadd.f32 %v47, %v58
  %v71 = vadd.f32 %v48, %v58
  %v72 = vadd.f32 %v49, %v58
  %v73 = vadd.f32 %v50, %v58
  %v74 = vadd.f32 %v51, %v58
  %v75 = vadd.f32 %v52, %v58
  %vm76 = vcmask 130048
  %77 = vst.msk [vmem:[%s3] sm:$0xff] %vm76, %v60
  %78 = vst.msk [vmem:[%s3 + $0x8] sm:$0xff] %vm76, %v61
  %79 = vst.msk [vmem:[%s3 + $0x10] sm:$0xff] %vm76, %v62
  %80 = vst.msk [vmem:[%s3 + $0x18] sm:$0xff] %vm76, %v63
  %81 = vst.msk [vmem:[%s3 + $0x20] sm:$0xff] %vm76, %v64
  %82 = vst.msk [vmem:[%s3 + $0x28] sm:$0xff] %vm76, %v65
  %83 = vst.msk [vmem:[%s3 + $0x30] sm:$0xff] %vm76, %v66
  %84 = vst.msk [vmem:[%s3 + $0x38] sm:$0xff] %vm76, %v67
  %85 = vst.msk [vmem:[%s3 + $0x40] sm:$0xff] %vm76, %v68
  %86 = vst.msk [vmem:[%s3 + $0x48] sm:$0xff] %vm76, %v69
  %87 = vst.msk [vmem:[%s3 + $0x50] sm:$0xff] %vm76, %v70
  %88 = vst.msk [vmem:[%s3 + $0x58] sm:$0xff] %vm76, %v71
  %89 = vst.msk [vmem:[%s3 + $0x60] sm:$0xff] %vm76, %v72
  %90 = vst.msk [vmem:[%s3 + $0x68] sm:$0xff] %vm76, %v73
  %91 = vst.msk [vmem:[%s3 + $0x70] sm:$0xff] %vm76, %v74
  %92 = vst.msk [vmem:[%s3 + $0x78] sm:$0xff] %vm76, %v75
  // Predicated region
  $region14: #{tpu_custom_call.1} parent=0 // pred_check
    _
  $region15: #{tpu_custom_call.1} parent=0 // pred_check_branch
    %94 = sbr.rel (0) target = $region17
  $region16: #{tpu_custom_call.1} parent=0 // pred_region
    _
  $region17: #{tpu_custom_call.1} parent=0 // pred_fallthru
    _
  // Predicated region
  $region18: #{tpu_custom_call.1} parent=0 // pred_check
    _
  $region19: #{tpu_custom_call.1} parent=0 // pred_check_branch
    %96 = sbr.rel (0) target = $region21
  $region20: #{tpu_custom_call.1} parent=0 // pred_region
    _
  $region21: #{tpu_custom_call.1} parent=0 // pred_fallthru
    _

</llo_original>
